<compile_context>
chip_gen: v6e
topology: v6e:2x2x1
jax: 0.10.0
libtpu: 0.0.40
codegen_flags: <defaults>
</compile_context>

<pallas_src>
import functools
import math

import jax
import jax.numpy as jnp
import numpy as np
from jax import lax
from jax.experimental import pallas as pl
from jax.experimental.pallas import tpu as pltpu


_LANES = 512              # f32 lanes per slab row (multiple of 128, even)
_MAX_BLOCK_ROWS = 1024    # 1024 * 512 * 4B = 2 MiB per f32 stream per buffer
_MIN_ROWS = 16            # bf16 sublane alignment for the phase-index plane
_FAST_PATH_MAX = 65536    # below this many complex elements, plain jnp is faster


# ----------------------------------------------------------------------------
# Kernel: y = exp(i * 2*pi*g/dim) * x on an interleaved [re, im, ...] f32 slab
# ----------------------------------------------------------------------------
def _cz_kernel(g_ref, x_ref, o_ref, *, dim, cols):
    x = x_ref[...]                                    # (TR, C) f32, interleaved complex
    g = g_ref[...].astype(jnp.float32)                # (TR, C) phase index in [0, dim)

    # cos/sin of the `dim` distinct phases via an unrolled select chain.
    a = jnp.full(x.shape, 1.0, jnp.float32)           # cos(theta)
    s = jnp.zeros(x.shape, jnp.float32)                # sin(theta)
    for j in range(1, dim):
        th = 2.0 * math.pi * j / dim
        hit = g == np.float32(j)
        a = jnp.where(hit, np.float32(math.cos(th)), a)
        s = jnp.where(hit, np.float32(math.sin(th)), s)

    # Interleaved complex multiply: even lanes = re, odd lanes = im.
    #   y_re = cos*x_re - sin*x_im ;  y_im = cos*x_im + sin*x_re
    # = a*x + b*swap(x) with b = -sin (even) / +sin (odd) and swap exchanging the
    # two lanes of each (re, im) pair (two XLU rolls + a parity select).
    lane = lax.broadcasted_iota(jnp.int32, x.shape, 1)
    even = (lane & 1) == 0
    b = jnp.where(even, -s, s)
    x_next = pltpu.roll(x, cols - 1, 1)               # x_next[p] = x[p + 1]
    x_prev = pltpu.roll(x, 1, 1)                      # x_prev[p] = x[p - 1]
    x_swap = jnp.where(even, x_next, x_prev)
    o_ref[...] = a * x + b * x_swap


def _pick_block_rows(rows):
    tr = min(_MAX_BLOCK_ROWS, rows)
    if rows > _MIN_ROWS:
        tr = min(tr, max(_MIN_ROWS, rows // 2))       # >= 2 grid steps (megacore)
    return max(_MIN_ROWS, (tr // _MIN_ROWS) * _MIN_ROWS)


# ----------------------------------------------------------------------------
# Precomputed (once per gate configuration, cached) auxiliary arrays
# ----------------------------------------------------------------------------
@functools.lru_cache(maxsize=None)
def _cz_phase_plane(dim, wires, control, target, batch, padded_len, cols):
    """(R, C) bf16 plane of phase indices g = (c_k*t_k) mod dim, one value per
    float32 lane of the interleaved state slab."""
    n = dim ** wires
    k = np.arange(n, dtype=np.int64)
    c = (k // (dim ** (wires - 1 - control))) % dim
    t = (k // (dim ** (wires - 1 - target))) % dim
    g = ((c * t) % dim).astype(np.float32)
    g = np.repeat(g, 2 * batch)                        # per batch column and re/im lane
    g = np.pad(g, (0, padded_len - g.size))
    dtype = jnp.bfloat16 if dim <= 256 else jnp.float32   # small ints exact in bf16
    return jnp.asarray(g.reshape(-1, cols), dtype=dtype)


@functools.lru_cache(maxsize=None)
def _cz_diag(dim, wires, control, target):
    n = dim ** wires
    k = np.arange(n, dtype=np.int64)
    c = (k // (dim ** (wires - 1 - control))) % dim
    t = (k // (dim ** (wires - 1 - target))) % dim
    phase = (2.0 * np.pi / dim) * ((c * t) % dim)
    return jnp.asarray(np.exp(1j * phase).astype(np.complex64))


# ----------------------------------------------------------------------------
# complex64 <-> interleaved float32 views (bitcast = no extra HBM pass)
# ----------------------------------------------------------------------------
def _to_interleaved_f32(xc):
    try:
        return lax.bitcast_convert_type(xc, jnp.float32)        # (..., 2)
    except Exception:  # fallback if complex bitcast is unsupported
        return jnp.stack([jnp.real(xc), jnp.imag(xc)], axis=-1).astype(jnp.float32)


def _from_interleaved_f32(xf):
    try:
        return lax.bitcast_convert_type(xf, jnp.complex64)
    except Exception:
        return (xf[..., 0] + 1j * xf[..., 1]).astype(jnp.complex64)


# ----------------------------------------------------------------------------
# Forward pass (same semantics as CZ.forward: y = U @ x)
# ----------------------------------------------------------------------------
def cz_forward(x, dim, wires, index, *, use_pallas=None):
    """Apply the quforge CZ gate to a state x of shape (dim**wires,) or (dim**wires, B)."""
    control, target = int(index[0]), int(index[1])
    n = dim ** wires
    orig_shape = x.shape
    x2 = x.reshape(n, -1).astype(jnp.complex64)
    batch = x2.shape[1]
    total = n * batch

    if use_pallas is None:
        use_pallas = total >= _FAST_PATH_MAX
    if not use_pallas:
        # Small states: a single fused XLA pass beats any custom-call launch.
        d = _cz_diag(dim, wires, control, target)
        return (d[:, None] * x2).reshape(orig_shape)

    # --- Pallas path: dense (rows, 512) f32 slab over the interleaved state. ---
    cols = _LANES
    flen = 2 * total
    rows = max(-(-flen // cols), _MIN_ROWS)
    padded_len = rows * cols
    block_rows = _pick_block_rows(rows)

    g = _cz_phase_plane(dim, wires, control, target, batch, padded_len, cols)

    xf = _to_interleaved_f32(x2.reshape(-1)).reshape(-1)         # (2*total,)
    if padded_len > flen:
        xf = jnp.pad(xf, (0, padded_len - flen))
    xf = xf.reshape(rows, cols)

    spec = pl.BlockSpec((block_rows, cols), lambda i: (i, 0))
    yf = pl.pallas_call(
        functools.partial(_cz_kernel, dim=dim, cols=cols),
        out_shape=jax.ShapeDtypeStruct((rows, cols), jnp.float32),
        grid=(-(-rows // block_rows),),
        in_specs=[spec, spec],
        out_specs=spec,
        compiler_params=pltpu.CompilerParams(
            dimension_semantics=("parallel",)),
    )(g, xf)

    yf = yf.reshape(-1)
    if padded_len > flen:
        yf = yf[:flen]
    y = _from_interleaved_f32(yf.reshape(total, 2))
    return y.reshape(orig_shape)


# ----------------------------------------------------------------------------
# Dense reference built exactly like the PyTorch CZ.__init__ (sum of krons)
# ----------------------------------------------------------------------------
def _cz_unitary_reference(dim, wires, index):
    omega = np.exp(2j * np.pi / dim)

    def z_gate(s):
        jj = np.arange(dim)
        return np.diag(omega ** (jj * s)).astype(np.complex64)

    basis = np.eye(dim, dtype=np.complex64)
    U = np.zeros((dim ** wires, dim ** wires), dtype=np.complex64)
    for d in range(dim):
        u = np.eye(1, dtype=np.complex64)
        for i in range(wires):
            if i == index[0]:
                u = np.kron(u, np.outer(basis[d], basis[d]))
            elif i == index[1]:
                u = np.kron(u, z_gate(d))
            else:
                u = np.kron(u, np.eye(dim, dtype=np.complex64))
        U = U + u
    return U


if __name__ == "__main__":
    key = jax.random.PRNGKey(0)

    def random_state(k, n, b):
        kr, ki = jax.random.split(k)
        return (jax.random.normal(kr, (n, b), dtype=jnp.float32)
                + 1j * jax.random.normal(ki, (n, b), dtype=jnp.float32)
                ).astype(jnp.complex64)

    # Case 1: qutrit register (dim=3, 4 wires, control=0, target=2), Pallas path,
    # checked against the dense kron-built unitary (exact mirror of torch __init__).
    dim, wires, index = 3, 4, (0, 2)
    n = dim ** wires
    key, k1 = jax.random.split(key)
    x = random_state(k1, n, 1)
    y = jax.block_until_ready(cz_forward(x, dim, wires, index, use_pallas=True))
    U = _cz_unitary_reference(dim, wires, list(index))
    y_ref = jnp.asarray(U) @ x
    assert y.shape == (n, 1) and y.dtype == jnp.complex64
    assert float(jnp.max(jnp.abs(y - y_ref))) < 1e-4
    # auto dispatch (small-N jnp fast path) must agree as well
    y_fast = jax.block_until_ready(cz_forward(x, dim, wires, index))
    assert float(jnp.max(jnp.abs(y_fast - y_ref))) < 1e-4

    # Case 2: qubit register (dim=2, 14 wires) -> multi-block tiled Pallas path.
    dim, wires, index = 2, 14, (1, 7)
    n = dim ** wires
    key, k2 = jax.random.split(key)
    x = random_state(k2, n, 1)
    y = jax.block_until_ready(cz_forward(x, dim, wires, index, use_pallas=True))
    d = _cz_diag(dim, wires, index[0], index[1])
    y_ref = d[:, None] * x
    assert float(jnp.max(jnp.abs(y - y_ref))) < 1e-4

    # Case 3: batched columns (B=3) through the Pallas path.
    dim, wires, index = 2, 10, (0, 9)
    n = dim ** wires
    key, k3 = jax.random.split(key)
    x = random_state(k3, n, 3)
    y = jax.block_until_ready(cz_forward(x, dim, wires, index, use_pallas=True))
    d = _cz_diag(dim, wires, index[0], index[1])
    y_ref = d[:, None] * x
    assert float(jnp.max(jnp.abs(y - y_ref))) < 1e-4

    print("KERNEL_OK")
</pallas_src>

<mosaic_0001>
module attributes {stable_mosaic.version = 11 : i64} {
  func.func @_cz_kernel(%arg0: i32, %arg1: memref<16x512xbf16, #tpu.memory_space<vmem>>, %arg2: memref<16x512xf32, #tpu.memory_space<vmem>>, %arg3: memref<16x512xf32, #tpu.memory_space<vmem>>) attributes {dimension_semantics = [#tpu.dimension_semantics<parallel>], iteration_bounds = array<i64: 1>, scalar_prefetch = 0 : i64, scratch_operands = 0 : i64, tpu.core_type = #tpu.core_type<tc>, window_params = [{transform_indices = @transform_0, window_bounds = array<i64: 16, 512>}, {transform_indices = @transform_1, window_bounds = array<i64: 16, 512>}, {transform_indices = @transform_2, window_bounds = array<i64: 16, 512>}]} {
    %c0 = arith.constant 0 : index
    %c0_0 = arith.constant 0 : index
    %0 = vector.load %arg2[%c0, %c0_0] : memref<16x512xf32, #tpu.memory_space<vmem>>, vector<16x512xf32>
    %c0_1 = arith.constant 0 : index
    %c0_2 = arith.constant 0 : index
    %1 = vector.load %arg1[%c0_1, %c0_2] : memref<16x512xbf16, #tpu.memory_space<vmem>>, vector<16x512xbf16>
    %2 = arith.extf %1 : vector<16x512xbf16> to vector<16x512xf32>
    %cst = arith.constant 1.000000e+00 : f32
    %3 = vector.broadcast %cst : f32 to vector<16x512xf32>
    %cst_3 = arith.constant 0.000000e+00 : f32
    %4 = vector.broadcast %cst_3 : f32 to vector<16x512xf32>
    %cst_4 = arith.constant 1.000000e+00 : f32
    %5 = vector.broadcast %cst_4 : f32 to vector<16x512xf32>
    %6 = arith.cmpf oeq, %2, %5 : vector<16x512xf32>
    %cst_5 = arith.constant -5.000000e-01 : f32
    %7 = vector.broadcast %cst_5 : f32 to vector<16x512xf32>
    %8 = arith.select %6, %7, %3 : vector<16x512xi1>, vector<16x512xf32>
    %cst_6 = arith.constant 0.866025388 : f32
    %9 = vector.broadcast %cst_6 : f32 to vector<16x512xf32>
    %10 = arith.select %6, %9, %4 : vector<16x512xi1>, vector<16x512xf32>
    %cst_7 = arith.constant 2.000000e+00 : f32
    %11 = vector.broadcast %cst_7 : f32 to vector<16x512xf32>
    %12 = arith.cmpf oeq, %2, %11 : vector<16x512xf32>
    %cst_8 = arith.constant -5.000000e-01 : f32
    %13 = vector.broadcast %cst_8 : f32 to vector<16x512xf32>
    %14 = arith.select %12, %13, %8 : vector<16x512xi1>, vector<16x512xf32>
    %cst_9 = arith.constant -0.866025388 : f32
    %15 = vector.broadcast %cst_9 : f32 to vector<16x512xf32>
    %16 = arith.select %12, %15, %10 : vector<16x512xi1>, vector<16x512xf32>
    %17 = tpu.iota {dimensions = array<i32: 1>} : vector<16x512xi32>
    %c1_i32 = arith.constant 1 : i32
    %18 = vector.broadcast %c1_i32 : i32 to vector<16x512xi32>
    %19 = arith.andi %17, %18 : vector<16x512xi32>
    %c0_i32 = arith.constant 0 : i32
    %20 = vector.broadcast %c0_i32 : i32 to vector<16x512xi32>
    %21 = arith.cmpi eq, %19, %20 : vector<16x512xi32>
    %cst_10 = arith.constant 0.000000e+00 : f32
    %22 = vector.broadcast %cst_10 : f32 to vector<16x512xf32>
    %23 = arith.subf %22, %16 : vector<16x512xf32>
    %24 = arith.select %21, %23, %16 : vector<16x512xi1>, vector<16x512xf32>
    %c511_i32 = arith.constant 511 : i32
    %25 = tpu.dynamic_rotate %0 by %c511_i32 dim 1 : vector<16x512xf32>, i32 -> vector<16x512xf32>
    %c1_i32_11 = arith.constant 1 : i32
    %26 = tpu.dynamic_rotate %0 by %c1_i32_11 dim 1 : vector<16x512xf32>, i32 -> vector<16x512xf32>
    %27 = arith.select %21, %25, %26 : vector<16x512xi1>, vector<16x512xf32>
    %28 = arith.mulf %14, %0 : vector<16x512xf32>
    %29 = arith.mulf %24, %27 : vector<16x512xf32>
    %30 = arith.addf %28, %29 : vector<16x512xf32>
    %c0_12 = arith.constant 0 : index
    %c0_13 = arith.constant 0 : index
    %31 = vector.load %arg3[%c0_12, %c0_13] : memref<16x512xf32, #tpu.memory_space<vmem>>, vector<16x512xf32>
    tpu.vector_store %arg3[%c0_12, %c0_13], %30 {strides = array<i32>} : memref<16x512xf32, #tpu.memory_space<vmem>>, vector<16x512xf32>,
    return
  }
  func.func @transform_0(%arg0: i32) -> (i32, i32) {
    %c0_i32 = arith.constant 0 : i32
    %c0_i32_0 = arith.constant 0 : i32
    return %arg0, %c0_i32 : i32, i32
  }
  func.func @transform_1(%arg0: i32) -> (i32, i32) {
    %c0_i32 = arith.constant 0 : i32
    %c0_i32_0 = arith.constant 0 : i32
    return %arg0, %c0_i32 : i32, i32
  }
  func.func @transform_2(%arg0: i32) -> (i32, i32) {
    %c0_i32 = arith.constant 0 : i32
    %c0_i32_0 = arith.constant 0 : i32
    return %arg0, %c0_i32 : i32, i32
  }
}

</mosaic_0001>

<llo_original>
// kernel: tpu_custom_call.1
$region0: #{tpu_custom_call.1}
  #allocation0 [shape = 'u32[]', space=smem, size = 0x4, offset = 0x4, fixed_abs, tag = 'smem constant byte address 0x4 - core index']
  #allocation1 [shape = 'u32[144,128]{1,0:T(1,128)}', space=vmem, size = 0x12000, scoped, tag = 'internal scratch']
  %s0 = inlined_call_operand.hbm [shape: bf16[16,512], index: 0, kind: input, shape index: {}]
  %s1 = inlined_call_operand.hbm [shape: f32[16,512], index: 1, kind: input, shape index: {}]
  %s2 = inlined_call_operand.hbm [shape: f32[16,512], index: 2, kind: output, shape index: {}]
  %s3 = sld [smem:[#allocation0]]
  $region26: #{tpu_custom_call.1} parent=0
    _
  %s5 = ssub.s32 1, %s3
  %s6 = scalar_select 0, %s5, %s3
  $region1: #{tpu_custom_call.1} parent=0
    #allocation2 [shape = 'u8[16384]{0}', space=vmem, size = 0x4000, scoped, tag = 'input window, operand 0, single buffered']
    #allocation3 [shape = 's32[1]{0}', space=sflag, size = 0x4, scoped, tag = 'scoped memory for tpu_custom_call.1']
    #allocation4 [shape = 's32[1]{0}', space=sflag, size = 0x4, scoped, tag = 'scoped memory for tpu_custom_call.1']
    #allocation5 [shape = 'u8[32768]{0}', space=vmem, size = 0x8000, scoped, tag = 'input window, operand 1, single buffered']
    #allocation6 [shape = 's32[1]{0}', space=sflag, size = 0x4, scoped, tag = 'scoped memory for tpu_custom_call.1']
    #allocation7 [shape = 'u8[32768]{0}', space=vmem, size = 0x8000, scoped, tag = 'output window, operand 0, single buffered']
    %7 = vsyncpa [#allocation3], 0
    %8 = vsyncpa [#allocation6], 0
    %9 = vsyncpa [#allocation4], 0
    // Predicated region
    $region2: #{tpu_custom_call.1} parent=1 // pred_check
      _
    $region3: #{tpu_custom_call.1} parent=1 // pred_check_branch
      %11 = sbr.rel (0) target = $region5
    $region4: #{tpu_custom_call.1} parent=1 // pred_region
      %s13 = ssub.s32 512, 512
      %14 = vsyncadd [#allocation3], %s13
      %s15 = sshll.u32 [#allocation2], 4
      %s16 = int_to_ptr.vmem [resolvable:$true] %s15
      %21 = dma.hbm_to_vmem [thread:$0]  %s0, 512, %s16, [#allocation3], 256, 256, 16
    $region5: #{tpu_custom_call.1} parent=1 // pred_fallthru
      _
    // Predicated region
    $region6: #{tpu_custom_call.1} parent=1 // pred_check
      _
    $region7: #{tpu_custom_call.1} parent=1 // pred_check_branch
      %23 = sbr.rel (0) target = $region9
    $region8: #{tpu_custom_call.1} parent=1 // pred_region
      %s25 = ssub.s32 1024, 1024
      %26 = vsyncadd [#allocation6], %s25
      %s27 = sshll.u32 [#allocation5], 4
      %s28 = int_to_ptr.vmem [resolvable:$true] %s27
      %33 = dma.hbm_to_vmem [thread:$0]  %s1, 1024, %s28, [#allocation6], 512, 512, 32
    $region9: #{tpu_custom_call.1} parent=1 // pred_fallthru
      _
    // Predicated region
    $region10: #{tpu_custom_call.1} parent=1 // pred_check
      _
    $region11: #{tpu_custom_call.1} parent=1 // pred_check_branch
      %35 = sbr.rel (0) target = $region13
    $region12: #{tpu_custom_call.1} parent=1 // pred_region
      %36 = dma.done [#allocation3], 512
    $region13: #{tpu_custom_call.1} parent=1 // pred_fallthru
      _
    // Predicated region
    $region14: #{tpu_custom_call.1} parent=1 // pred_check
      _
    $region15: #{tpu_custom_call.1} parent=1 // pred_check_branch
      %38 = sbr.rel (0) target = $region17
    $region16: #{tpu_custom_call.1} parent=1 // pred_region
      %39 = dma.done [#allocation6], 1024
    $region17: #{tpu_custom_call.1} parent=1 // pred_fallthru
      _
    %v40 = vld [vmem:[#allocation5] sm:$0xff]
    %v41 = vld [vmem:[#allocation5 + $0x8] sm:$0xff]
    %v42 = vld [vmem:[#allocation5 + $0x10] sm:$0xff]
    %v43 = vld [vmem:[#allocation5 + $0x18] sm:$0xff]
    %v44 = vld [vmem:[#allocation5 + $0x20] sm:$0xff]
    %v45 = vld [vmem:[#allocation5 + $0x28] sm:$0xff]
    %v46 = vld [vmem:[#allocation5 + $0x30] sm:$0xff]
    %v47 = vld [vmem:[#allocation5 + $0x38] sm:$0xff]
    %v48 = vld [vmem:[#allocation2] sm:$0xff]
    %v49 = vld [vmem:[#allocation2 + $0x8] sm:$0xff]
    %v50 = vld [vmem:[#allocation2 + $0x10] sm:$0xff]
    %v51 = vld [vmem:[#allocation2 + $0x18] sm:$0xff]
    %v52 = vunpack.c.l.bf16 %v48
    %v53 = vunpack.c.h.bf16 %v48
    %v54 = vunpack.c.l.bf16 %v49
    %v55 = vunpack.c.h.bf16 %v49
    %v56 = vunpack.c.l.bf16 %v50
    %v57 = vunpack.c.h.bf16 %v50
    %v58 = vunpack.c.l.bf16 %v51
    %v59 = vunpack.c.h.bf16 %v51
    %vm60 = vcmp.eq.f32.partialorder %v52, 1.0
    %vm61 = vcmp.eq.f32.partialorder %v53, 1.0
    %vm62 = vcmp.eq.f32.partialorder %v54, 1.0
    %vm63 = vcmp.eq.f32.partialorder %v55, 1.0
    %vm64 = vcmp.eq.f32.partialorder %v56, 1.0
    %vm65 = vcmp.eq.f32.partialorder %v57, 1.0
    %vm66 = vcmp.eq.f32.partialorder %v58, 1.0
    %vm67 = vcmp.eq.f32.partialorder %v59, 1.0
    %v68 = vsel %vm60, -0.5, 1.0
    %v69 = vsel %vm61, -0.5, 1.0
    %v70 = vsel %vm62, -0.5, 1.0
    %v71 = vsel %vm63, -0.5, 1.0
    %v72 = vsel %vm64, -0.5, 1.0
    %v73 = vsel %vm65, -0.5, 1.0
    %v74 = vsel %vm66, -0.5, 1.0
    %v75 = vsel %vm67, -0.5, 1.0
    %v76 = vsel %vm60, 0.8660254, 0.0
    %v77 = vsel %vm61, 0.8660254, 0.0
    %v78 = vsel %vm62, 0.8660254, 0.0
    %v79 = vsel %vm63, 0.8660254, 0.0
    %v80 = vsel %vm64, 0.8660254, 0.0
    %v81 = vsel %vm65, 0.8660254, 0.0
    %v82 = vsel %vm66, 0.8660254, 0.0
    %v83 = vsel %vm67, 0.8660254, 0.0
    %vm84 = vcmp.eq.f32.partialorder %v52, 2.0
    %vm85 = vcmp.eq.f32.partialorder %v53, 2.0
    %vm86 = vcmp.eq.f32.partialorder %v54, 2.0
    %vm87 = vcmp.eq.f32.partialorder %v55, 2.0
    %vm88 = vcmp.eq.f32.partialorder %v56, 2.0
    %vm89 = vcmp.eq.f32.partialorder %v57, 2.0
    %vm90 = vcmp.eq.f32.partialorder %v58, 2.0
    %vm91 = vcmp.eq.f32.partialorder %v59, 2.0
    %v92 = vsel %vm84, -0.5, %v68
    %v93 = vsel %vm85, -0.5, %v69
    %v94 = vsel %vm86, -0.5, %v70
    %v95 = vsel %vm87, -0.5, %v71
    %v96 = vsel %vm88, -0.5, %v72
    %v97 = vsel %vm89, -0.5, %v73
    %v98 = vsel %vm90, -0.5, %v74
    %v99 = vsel %vm91, -0.5, %v75
    %v100 = vsel %vm84, -0.8660254, %v76
    %v101 = vsel %vm85, -0.8660254, %v77
    %v102 = vsel %vm86, -0.8660254, %v78
    %v103 = vsel %vm87, -0.8660254, %v79
    %v104 = vsel %vm88, -0.8660254, %v80
    %v105 = vsel %vm89, -0.8660254, %v81
    %v106 = vsel %vm90, -0.8660254, %v82
    %v107 = vsel %vm91, -0.8660254, %v83
    %v108 = vlaneseq
    %v109 = vand.u32 %v108, 127
    %v110 = vadd.s32 %v109, 128
    %v111 = vadd.s32 %v109, 256
    %v112 = vadd.s32 %v109, 384
    %v113 = vand.u32 %v109, 1
    %v114 = vand.u32 %v110, 1
    %v115 = vand.u32 %v111, 1
    %v116 = vand.u32 %v112, 1
    %vm117 = vcmp.eq.s32.totalorder %v113, 0
    %vm118 = vcmp.eq.s32.totalorder %v114, 0
    %vm119 = vcmp.eq.s32.totalorder %v115, 0
    %vm120 = vcmp.eq.s32.totalorder %v116, 0
    %v121 = vsub.f32 0.0, %v100
    %v122 = vsub.f32 0.0, %v101
    %v123 = vsub.f32 0.0, %v102
    %v124 = vsub.f32 0.0, %v103
    %v125 = vsub.f32 0.0, %v104
    %v126 = vsub.f32 0.0, %v105
    %v127 = vsub.f32 0.0, %v106
    %v128 = vsub.f32 0.0, %v107
    %v129 = vsel %vm117, %v121, %v100
    %v130 = vsel %vm118, %v122, %v101
    %v131 = vsel %vm119, %v123, %v102
    %v132 = vsel %vm120, %v124, %v103
    %v133 = vsel %vm117, %v125, %v104
    %v134 = vsel %vm118, %v126, %v105
    %v135 = vsel %vm119, %v127, %v106
    %v136 = vsel %vm120, %v128, %v107
    %137 = vrot.lane.b32.xlu0 %v40, 127
    %v138 = vpop.permute.xlu0 %137
    %139 = vrot.lane.b32.xlu0 %v44, 127
    %v140 = vpop.permute.xlu0 %139
    %141 = vrot.lane.b32.xlu0 %v41, 127
    %v142 = vpop.permute.xlu0 %141
    %143 = vrot.lane.b32.xlu0 %v45, 127
    %v144 = vpop.permute.xlu0 %143
    %145 = vrot.lane.b32.xlu0 %v42, 127
    %v146 = vpop.permute.xlu0 %145
    %147 = vrot.lane.b32.xlu0 %v46, 127
    %v148 = vpop.permute.xlu0 %147
    %149 = vrot.lane.b32.xlu0 %v43, 127
    %v150 = vpop.permute.xlu0 %149
    %151 = vrot.lane.b32.xlu0 %v47, 127
    %v152 = vpop.permute.xlu0 %151
    %vm153 = vcmp.lt.s32.totalorder %v109, 127
    %v154 = vsel %vm153, %v146, %v150
    %v155 = vsel %vm153, %v148, %v152
    %v156 = vsel %vm153, %v142, %v146
    %v157 = vsel %vm153, %v144, %v148
    %v158 = vsel %vm153, %v138, %v142
    %v159 = vsel %vm153, %v140, %v144
    %v160 = vsel %vm153, %v150, %v138
    %v161 = vsel %vm153, %v152, %v140
    %162 = vrot.lane.b32.xlu0 %v40, 1
    %v163 = vpop.permute.xlu0 %162
    %164 = vrot.lane.b32.xlu0 %v44, 1
    %v165 = vpop.permute.xlu0 %164
    %166 = vrot.lane.b32.xlu0 %v41, 1
    %v167 = vpop.permute.xlu0 %166
    %168 = vrot.lane.b32.xlu0 %v45, 1
    %v169 = vpop.permute.xlu0 %168
    %170 = vrot.lane.b32.xlu0 %v42, 1
    %v171 = vpop.permute.xlu0 %170
    %172 = vrot.lane.b32.xlu0 %v46, 1
    %v173 = vpop.permute.xlu0 %172
    %174 = vrot.lane.b32.xlu0 %v43, 1
    %v175 = vpop.permute.xlu0 %174
    %176 = vrot.lane.b32.xlu0 %v47, 1
    %v177 = vpop.permute.xlu0 %176
    %vm178 = vcmp.lt.s32.totalorder %v109, 1
    %v179 = vsel %vm178, %v171, %v175
    %v180 = vsel %vm178, %v173, %v177
    %v181 = vsel %vm178, %v167, %v171
    %v182 = vsel %vm178, %v169, %v173
    %v183 = vsel %vm178, %v163, %v167
    %v184 = vsel %vm178, %v165, %v169
    %v185 = vsel %vm178, %v175, %v163
    %v186 = vsel %vm178, %v177, %v165
    %v187 = vsel %vm117, %v158, %v185
    %v188 = vsel %vm118, %v156, %v183
    %v189 = vsel %vm119, %v154, %v181
    %v190 = vsel %vm120, %v160, %v179
    %v191 = vsel %vm117, %v159, %v186
    %v192 = vsel %vm118, %v157, %v184
    %v193 = vsel %vm119, %v155, %v182
    %v194 = vsel %vm120, %v161, %v180
    %v195 = vmul.f32 %v92, %v40
    %v196 = vmul.f32 %v93, %v41
    %v197 = vmul.f32 %v94, %v42
    %v198 = vmul.f32 %v95, %v43
    %v199 = vmul.f32 %v96, %v44
    %v200 = vmul.f32 %v97, %v45
    %v201 = vmul.f32 %v98, %v46
    %v202 = vmul.f32 %v99, %v47
    %v203 = vmul.f32 %v129, %v187
    %v204 = vmul.f32 %v130, %v188
    %v205 = vmul.f32 %v131, %v189
    %v206 = vmul.f32 %v132, %v190
    %v207 = vmul.f32 %v133, %v191
    %v208 = vmul.f32 %v134, %v192
    %v209 = vmul.f32 %v135, %v193
    %v210 = vmul.f32 %v136, %v194
    %v211 = vadd.f32 %v195, %v203
    %v212 = vadd.f32 %v196, %v204
    %v213 = vadd.f32 %v197, %v205
    %v214 = vadd.f32 %v198, %v206
    %v215 = vadd.f32 %v199, %v207
    %v216 = vadd.f32 %v200, %v208
    %v217 = vadd.f32 %v201, %v209
    %v218 = vadd.f32 %v202, %v210
    %219 = vst [vmem:[#allocation7] sm:$0xff] %v211
    %220 = vst [vmem:[#allocation7 + $0x8] sm:$0xff] %v212
    %221 = vst [vmem:[#allocation7 + $0x10] sm:$0xff] %v213
    %222 = vst [vmem:[#allocation7 + $0x18] sm:$0xff] %v214
    %223 = vst [vmem:[#allocation7 + $0x20] sm:$0xff] %v215
    %224 = vst [vmem:[#allocation7 + $0x28] sm:$0xff] %v216
    %225 = vst [vmem:[#allocation7 + $0x30] sm:$0xff] %v217
    %226 = vst [vmem:[#allocation7 + $0x38] sm:$0xff] %v218
    // Predicated region
    $region18: #{tpu_custom_call.1} parent=1 // pred_check
      _
    $region19: #{tpu_custom_call.1} parent=1 // pred_check_branch
      %228 = sbr.rel (0) target = $region21
    $region20: #{tpu_custom_call.1} parent=1 // pred_region
      %s230 = ssub.s32 1024, 1024
      %231 = vsyncadd [#allocation4], %s230
      %s232 = sshll.u32 [#allocation7], 4
      %s233 = int_to_ptr.vmem [resolvable:$true] %s232
      %238 = dma.vmem_to_hbm [thread:$0]  %s233, 1024, %s2, [#allocation4], 512, 512, 32
    $region21: #{tpu_custom_call.1} parent=1 // pred_fallthru
      _
    // Predicated region
    $region22: #{tpu_custom_call.1} parent=1 // pred_check
      _
    $region23: #{tpu_custom_call.1} parent=1 // pred_check_branch
      %240 = sbr.rel (0) target = $region25
    $region24: #{tpu_custom_call.1} parent=1 // pred_region
      %241 = dma.done [#allocation4], 1024
    $region25: #{tpu_custom_call.1} parent=1 // pred_fallthru
      _
    %242 = vsyncpa [#allocation3], 1
    %243 = vsyncpa [#allocation6], 1
    %244 = vsyncpa [#allocation4], 1

</llo_original>
